<compile_context>
chip_gen: v5e
topology: v5e:2x2
jax: 0.10.0
libtpu: 0.0.40
codegen_flags: <defaults>
</compile_context>

<pallas_src>
import functools

import jax
import jax.numpy as jnp
from jax.experimental import pallas as pl
from jax.experimental.pallas import tpu as pltpu

D_IN = 1024
D_H1 = 128
D_H2 = 64
D_OUT = 1
LANE = 128           # padded output width (lane-dense, unmasked vst)
BN_EPS = 1e-5


def _round_up(n, m):
    return ((n + m - 1) // m) * m


_rep = lambda i: (0, 0)  # weights/biases: constant block index -> VMEM-resident


def _mlp_kernel(x_ref, w1_ref, b1_ref, w2_ref, b2_ref, w3_ref, b3_ref, o_ref):
    # x arrives as f32 (read from HBM once); cast to bf16 on the VPU just before
    # the MXU so the matmul is single-pass bf16 with f32 accumulation.
    x = x_ref[...].astype(jnp.bfloat16)                              # (TB, 1024)

    # layer_3_small + ReLU
    h1 = jnp.dot(x, w1_ref[...], preferred_element_type=jnp.float32)
    h1 = jnp.maximum(h1 + b1_ref[...], 0.0)

    # dropout (eval) -> identity; BN3 is folded into W2/b2.
    # layer_4 + ReLU  (f32 operands: MXU has slack under the x DMA)
    h2 = jnp.dot(h1, w2_ref[...], preferred_element_type=jnp.float32)
    h2 = jnp.maximum(h2 + b2_ref[...], 0.0)

    # BN4 folded into W3/b3; dropout (eval) -> identity.
    # layer_out, padded to 128 output lanes; store as bf16 (halves writeback).
    out = jnp.dot(h2, w3_ref[...], preferred_element_type=jnp.float32)
    o_ref[...] = (out + b3_ref[...]).astype(o_ref.dtype)


@functools.partial(jax.jit, static_argnames=("block_b",))
def binary_classification_forward(x, params, block_b=1024):
    """x: (B, 1024) f32.  params: raw (w1,b1,s3,t3,w2,b2,s4,t4,w3,b3)."""
    w1, b1, s3, t3, w2, b2, s4, t4, w3, b3 = params
    B = x.shape[0]

    # ---- Fold eval-mode BatchNorm affines into the following Linear layers ----
    # (relu_h1 * s3 + t3) @ W2 + b2  ==  relu_h1 @ (s3^T * W2) + (b2 + t3 @ W2)
    w2f = s3.reshape(D_H1, 1) * w2                         # (128, 64)
    b2f = b2 + t3 @ w2                                     # (1, 64)
    w3f = s4.reshape(D_H2, 1) * w3                         # (64, 1)
    b3f = b3 + t4 @ w3                                     # (1, 1)

    # ---- Lane-dense final layer: pad output width 1 -> 128 (zeros elsewhere) ----
    w3p = jnp.zeros((D_H2, LANE), jnp.float32).at[:, :D_OUT].set(w3f)
    b3p = jnp.zeros((1, LANE), jnp.float32).at[:, :D_OUT].set(b3f)

    # Only the small first-layer weight is pre-cast to bf16 (one-off 0.5 MiB
    # fusion); x stays f32 and is cast in-kernel so it is read from HBM once.
    w1_bf = w1.astype(jnp.bfloat16)

    # ---- Batch tiling ----
    # Sublane-aligned tile; non-divisible batches use Pallas' masked boundary
    # blocks (no jnp.pad copy of x).  Cap the block so there are >= 2 grid
    # steps whenever possible, so the parallel grid axis feeds both v7x TCs.
    if B >= 8:
        block = min(_round_up(block_b, 8), _round_up(pl.cdiv(B, 2), 8))
        block = max(block, 8)
    else:
        block = B                      # full-extent rows for tiny batches
    grid = (pl.cdiv(B, block),)

    out_padded = pl.pallas_call(
        _mlp_kernel,
        out_shape=jax.ShapeDtypeStruct((B, LANE), jnp.bfloat16),
        grid_spec=pltpu.PrefetchScalarGridSpec(
            num_scalar_prefetch=0,
            grid=grid,
            in_specs=[
                pl.BlockSpec((block, D_IN), lambda i: (i, 0)),   # x tile (f32)
                pl.BlockSpec((D_IN, D_H1), _rep),                # W1 (bf16, in x out)
                pl.BlockSpec((1, D_H1), _rep),                   # b1
                pl.BlockSpec((D_H1, D_H2), _rep),                # W2 (BN3 folded)
                pl.BlockSpec((1, D_H2), _rep),                   # b2 (BN3 folded)
                pl.BlockSpec((D_H2, LANE), _rep),                # W3 padded (BN4 folded)
                pl.BlockSpec((1, LANE), _rep),                   # b3 padded (BN4 folded)
            ],
            out_specs=pl.BlockSpec((block, LANE), lambda i: (i, 0)),
        ),
        compiler_params=pltpu.CompilerParams(
            dimension_semantics=("parallel",),   # shards batch grid across TCs (v7x)
            vmem_limit_bytes=48 << 20,           # fits block<=2048 double-buffered
        ),
    )(x, w1_bf, b1, w2f, b2f, w3p, b3p)

    # Only the first lane is the real logit; cast the tiny slice back to f32.
    return out_padded[:, :D_OUT].astype(jnp.float32)


def init_params(key):
    """Deterministic synthetic parameters matching the PyTorch module shapes."""
    ks = jax.random.split(key, 10)

    def linear(kw, kb, fan_in, fan_out):
        bound = 1.0 / jnp.sqrt(fan_in)
        # stored transposed: (in, out)
        w = jax.random.uniform(kw, (fan_in, fan_out), jnp.float32, -bound, bound)
        b = jax.random.uniform(kb, (1, fan_out), jnp.float32, -bound, bound)
        return w, b

    w1, b1 = linear(ks[0], ks[1], D_IN, D_H1)
    w2, b2 = linear(ks[2], ks[3], D_H1, D_H2)
    w3, b3 = linear(ks[4], ks[5], D_H2, D_OUT)

    def bn_affine(kg, kb, dim):
        # PyTorch default init: gamma=1, beta=0, running_mean=0, running_var=1.
        # Perturb slightly (deterministically) so the BN math is exercised.
        gamma = 1.0 + 0.1 * jax.random.normal(kg, (dim,), jnp.float32)
        beta = 0.1 * jax.random.normal(kb, (dim,), jnp.float32)
        running_mean = jnp.zeros((dim,), jnp.float32)
        running_var = jnp.ones((dim,), jnp.float32)
        scale = gamma / jnp.sqrt(running_var + BN_EPS)
        shift = beta - running_mean * scale
        return scale.reshape(1, dim), shift.reshape(1, dim)

    s3, t3 = bn_affine(ks[6], ks[7], D_H1)
    s4, t4 = bn_affine(ks[8], ks[9], D_H2)

    return (w1, b1, s3, t3, w2, b2, s4, t4, w3, b3)


def reference_forward(x, params):
    """Pure-JAX reference mirroring the kernel's bf16 layer-1 operands and bf16 store."""
    w1, b1, s3, t3, w2, b2, s4, t4, w3, b3 = params
    xb = x.astype(jnp.bfloat16).astype(jnp.float32)
    w1b = w1.astype(jnp.bfloat16).astype(jnp.float32)
    hp = jax.lax.Precision.HIGHEST
    h1 = jnp.maximum(jnp.dot(xb, w1b, precision=hp) + b1, 0.0)
    h1 = h1 * s3 + t3
    h2 = jnp.maximum(jnp.dot(h1, w2, precision=hp) + b2, 0.0)
    h2 = h2 * s4 + t4
    out = jnp.dot(h2, w3, precision=hp) + b3
    # Kernel stores its padded output as bf16; mirror that rounding.
    return out.astype(jnp.bfloat16).astype(jnp.float32)


if __name__ == "__main__":
    key = jax.random.PRNGKey(0)
    k_x, k_p = jax.random.split(key)
    params = init_params(k_p)

    # B=8: single aligned tile.  B=12: exercises the masked (non-divisible)
    # boundary block so the no-pad remainder path is verified.
    for B in (8, 12):
        x = jax.random.normal(jax.random.fold_in(k_x, B), (B, D_IN), jnp.float32)
        out = jax.block_until_ready(binary_classification_forward(x, params))
        ref = reference_forward(x, params)
        assert out.shape == (B, D_OUT)
        assert jnp.allclose(out, ref, atol=1e-2, rtol=1e-2), f"mismatch vs reference (B={B})"

    print("KERNEL_OK")
</pallas_src>

<mosaic_0001>
module attributes {stable_mosaic.version = 11 : i64} {
  func.func @_mlp_kernel(%arg0: i32, %arg1: memref<8x1024xf32, #tpu.memory_space<vmem>>, %arg2: memref<1024x128xbf16, #tpu.memory_space<vmem>>, %arg3: memref<1x128xf32, #tpu.memory_space<vmem>>, %arg4: memref<128x64xf32, #tpu.memory_space<vmem>>, %arg5: memref<1x64xf32, #tpu.memory_space<vmem>>, %arg6: memref<64x128xf32, #tpu.memory_space<vmem>>, %arg7: memref<1x128xf32, #tpu.memory_space<vmem>>, %arg8: memref<8x128xbf16, #tpu.memory_space<vmem>>) attributes {dimension_semantics = [#tpu.dimension_semantics<parallel>], iteration_bounds = array<i64: 1>, scalar_prefetch = 0 : i64, scratch_operands = 0 : i64, tpu.core_type = #tpu.core_type<tc>, window_params = [{transform_indices = @transform_0, window_bounds = array<i64: 8, 1024>}, {pipeline_mode = #tpu.pipeline_mode<synchronous>, transform_indices = @transform_1, window_bounds = array<i64: 1024, 128>}, {pipeline_mode = #tpu.pipeline_mode<synchronous>, transform_indices = @transform_2, window_bounds = array<i64: 1, 128>}, {pipeline_mode = #tpu.pipeline_mode<synchronous>, transform_indices = @transform_3, window_bounds = array<i64: 128, 64>}, {pipeline_mode = #tpu.pipeline_mode<synchronous>, transform_indices = @transform_4, window_bounds = array<i64: 1, 64>}, {pipeline_mode = #tpu.pipeline_mode<synchronous>, transform_indices = @transform_5, window_bounds = array<i64: 64, 128>}, {pipeline_mode = #tpu.pipeline_mode<synchronous>, transform_indices = @transform_6, window_bounds = array<i64: 1, 128>}, {transform_indices = @transform_7, window_bounds = array<i64: 8, 128>}]} {
    %c0 = arith.constant 0 : index
    %c0_0 = arith.constant 0 : index
    %0 = vector.load %arg1[%c0, %c0_0] : memref<8x1024xf32, #tpu.memory_space<vmem>>, vector<8x1024xf32>
    %1 = arith.truncf %0 : vector<8x1024xf32> to vector<8x1024xbf16>
    %c0_1 = arith.constant 0 : index
    %c0_2 = arith.constant 0 : index
    %2 = vector.load %arg2[%c0_1, %c0_2] : memref<1024x128xbf16, #tpu.memory_space<vmem>>, vector<1024x128xbf16>
    %cst = arith.constant dense<0.000000e+00> : vector<8x128xf32>
    %3 = tpu.matmul %1, %2, %cst {dimension_numbers = #tpu.dot_dimension_numbers<[1], [0], [0], [1], [0, 0, 1, 1], [], []>} : vector<8x1024xbf16>, vector<1024x128xbf16>, vector<8x128xf32> -> vector<8x128xf32>
    %c0_3 = arith.constant 0 : index
    %c0_4 = arith.constant 0 : index
    %4 = vector.load %arg3[%c0_3, %c0_4] : memref<1x128xf32, #tpu.memory_space<vmem>>, vector<1x128xf32>
    %5 = vector.broadcast %4 : vector<1x128xf32> to vector<8x128xf32>
    %6 = arith.addf %3, %5 : vector<8x128xf32>
    %cst_5 = arith.constant 0.000000e+00 : f32
    %7 = vector.broadcast %cst_5 : f32 to vector<8x128xf32>
    %8 = arith.maximumf %6, %7 : vector<8x128xf32>
    %c0_6 = arith.constant 0 : index
    %c0_7 = arith.constant 0 : index
    %9 = vector.load %arg4[%c0_6, %c0_7] : memref<128x64xf32, #tpu.memory_space<vmem>>, vector<128x64xf32>
    %cst_8 = arith.constant dense<0.000000e+00> : vector<8x64xf32>
    %10 = tpu.matmul %8, %9, %cst_8 {dimension_numbers = #tpu.dot_dimension_numbers<[1], [0], [0], [1], [0, 0, 1, 1], [], []>} : vector<8x128xf32>, vector<128x64xf32>, vector<8x64xf32> -> vector<8x64xf32>
    %c0_9 = arith.constant 0 : index
    %c0_10 = arith.constant 0 : index
    %11 = vector.load %arg5[%c0_9, %c0_10] : memref<1x64xf32, #tpu.memory_space<vmem>>, vector<1x64xf32>
    %12 = vector.broadcast %11 : vector<1x64xf32> to vector<8x64xf32>
    %13 = arith.addf %10, %12 : vector<8x64xf32>
    %cst_11 = arith.constant 0.000000e+00 : f32
    %14 = vector.broadcast %cst_11 : f32 to vector<8x64xf32>
    %15 = arith.maximumf %13, %14 : vector<8x64xf32>
    %c0_12 = arith.constant 0 : index
    %c0_13 = arith.constant 0 : index
    %16 = vector.load %arg6[%c0_12, %c0_13] : memref<64x128xf32, #tpu.memory_space<vmem>>, vector<64x128xf32>
    %cst_14 = arith.constant dense<0.000000e+00> : vector<8x128xf32>
    %17 = tpu.matmul %15, %16, %cst_14 {dimension_numbers = #tpu.dot_dimension_numbers<[1], [0], [0], [1], [0, 0, 1, 1], [], []>} : vector<8x64xf32>, vector<64x128xf32>, vector<8x128xf32> -> vector<8x128xf32>
    %c0_15 = arith.constant 0 : index
    %c0_16 = arith.constant 0 : index
    %18 = vector.load %arg7[%c0_15, %c0_16] : memref<1x128xf32, #tpu.memory_space<vmem>>, vector<1x128xf32>
    %19 = vector.broadcast %18 : vector<1x128xf32> to vector<8x128xf32>
    %20 = arith.addf %17, %19 : vector<8x128xf32>
    %21 = arith.truncf %20 : vector<8x128xf32> to vector<8x128xbf16>
    %c0_17 = arith.constant 0 : index
    %c0_18 = arith.constant 0 : index
    %22 = vector.load %arg8[%c0_17, %c0_18] : memref<8x128xbf16, #tpu.memory_space<vmem>>, vector<8x128xbf16>
    tpu.vector_store %arg8[%c0_17, %c0_18], %21 {strides = array<i32>} : memref<8x128xbf16, #tpu.memory_space<vmem>>, vector<8x128xbf16>,
    return
  }
  func.func @transform_0(%arg0: i32) -> (i32, i32) {
    %c0_i32 = arith.constant 0 : i32
    %c0_i32_0 = arith.constant 0 : i32
    return %arg0, %c0_i32 : i32, i32
  }
  func.func @transform_1(%arg0: i32) -> (i32, i32) {
    %c0_i32 = arith.constant 0 : i32
    %c0_i32_0 = arith.constant 0 : i32
    %c0_i32_1 = arith.constant 0 : i32
    return %c0_i32, %c0_i32_0 : i32, i32
  }
  func.func @transform_2(%arg0: i32) -> (i32, i32) {
    %c0_i32 = arith.constant 0 : i32
    %c0_i32_0 = arith.constant 0 : i32
    %c0_i32_1 = arith.constant 0 : i32
    return %c0_i32, %c0_i32_0 : i32, i32
  }
  func.func @transform_3(%arg0: i32) -> (i32, i32) {
    %c0_i32 = arith.constant 0 : i32
    %c0_i32_0 = arith.constant 0 : i32
    %c0_i32_1 = arith.constant 0 : i32
    return %c0_i32, %c0_i32_0 : i32, i32
  }
  func.func @transform_4(%arg0: i32) -> (i32, i32) {
    %c0_i32 = arith.constant 0 : i32
    %c0_i32_0 = arith.constant 0 : i32
    %c0_i32_1 = arith.constant 0 : i32
    return %c0_i32, %c0_i32_0 : i32, i32
  }
  func.func @transform_5(%arg0: i32) -> (i32, i32) {
    %c0_i32 = arith.constant 0 : i32
    %c0_i32_0 = arith.constant 0 : i32
    %c0_i32_1 = arith.constant 0 : i32
    return %c0_i32, %c0_i32_0 : i32, i32
  }
  func.func @transform_6(%arg0: i32) -> (i32, i32) {
    %c0_i32 = arith.constant 0 : i32
    %c0_i32_0 = arith.constant 0 : i32
    %c0_i32_1 = arith.constant 0 : i32
    return %c0_i32, %c0_i32_0 : i32, i32
  }
  func.func @transform_7(%arg0: i32) -> (i32, i32) {
    %c0_i32 = arith.constant 0 : i32
    %c0_i32_0 = arith.constant 0 : i32
    return %arg0, %c0_i32 : i32, i32
  }
}

</mosaic_0001>

<llo_original>
// kernel: binary_classification_forward.1
$region0: #{binary_classification_forward.1}
  #allocation0 [shape = 'u32[]', space=smem, size = 0x4, offset = 0x4, fixed_abs, tag = 'smem constant byte address 0x4 - core index']
  #allocation1 [shape = 'u32[72,128]{1,0:T(1,128)}', space=vmem, size = 0x9000, scoped, tag = 'internal scratch']
  %s0 = inlined_call_operand.vmem [shape: f32[8,1024], index: 0, kind: input, shape index: {}]
  %s1 = inlined_call_operand.vmem [shape: bf16[1024,128], index: 1, kind: input, shape index: {}]
  %s2 = inlined_call_operand.vmem [shape: f32[1,128], index: 2, kind: input, shape index: {}]
  %s3 = inlined_call_operand.vmem [shape: f32[128,64], index: 3, kind: input, shape index: {}]
  %s4 = inlined_call_operand.vmem [shape: f32[1,64], index: 4, kind: input, shape index: {}]
  %s5 = inlined_call_operand.vmem [shape: f32[64,128], index: 5, kind: input, shape index: {}]
  %s6 = inlined_call_operand.vmem [shape: f32[1,128], index: 6, kind: input, shape index: {}]
  %s7 = inlined_call_operand.vmem [shape: bf16[8,128], index: 7, kind: output, shape index: {}]
  %s8 = sld [smem:[#allocation0]]
  $region38: #{binary_classification_forward.1} parent=0
    _
  %s10 = ssub.s32 1, %s8
  %s11 = scalar_select 0, %s10, %s8
  // Predicated region
  $region2: #{binary_classification_forward.1} parent=0 // pred_check
    _
  $region3: #{binary_classification_forward.1} parent=0 // pred_check_branch
    %13 = sbr.rel (0) target = $region5
  $region4: #{binary_classification_forward.1} parent=0 // pred_region
    _
  $region5: #{binary_classification_forward.1} parent=0 // pred_fallthru
    _
  // Predicated region
  $region6: #{binary_classification_forward.1} parent=0 // pred_check
    _
  $region7: #{binary_classification_forward.1} parent=0 // pred_check_branch
    %15 = sbr.rel (0) target = $region9
  $region8: #{binary_classification_forward.1} parent=0 // pred_region
    _
  $region9: #{binary_classification_forward.1} parent=0 // pred_fallthru
    _
  // Predicated region
  $region10: #{binary_classification_forward.1} parent=0 // pred_check
    _
  $region11: #{binary_classification_forward.1} parent=0 // pred_check_branch
    %17 = sbr.rel (0) target = $region13
  $region12: #{binary_classification_forward.1} parent=0 // pred_region
    _
  $region13: #{binary_classification_forward.1} parent=0 // pred_fallthru
    _
  // Predicated region
  $region14: #{binary_classification_forward.1} parent=0 // pred_check
    _
  $region15: #{binary_classification_forward.1} parent=0 // pred_check_branch
    %19 = sbr.rel (0) target = $region17
  $region16: #{binary_classification_forward.1} parent=0 // pred_region
    _
  $region17: #{binary_classification_forward.1} parent=0 // pred_fallthru
    _
  // Predicated region
  $region18: #{binary_classification_forward.1} parent=0 // pred_check
    _
  $region19: #{binary_classification_forward.1} parent=0 // pred_check_branch
    %21 = sbr.rel (0) target = $region21
  $region20: #{binary_classification_forward.1} parent=0 // pred_region
    _
  $region21: #{binary_classification_forward.1} parent=0 // pred_fallthru
    _
  // Predicated region
  $region22: #{binary_classification_forward.1} parent=0 // pred_check
    _
  $region23: #{binary_classification_forward.1} parent=0 // pred_check_branch
    %23 = sbr.rel (0) target = $region25
  $region24: #{binary_classification_forward.1} parent=0 // pred_region
    _
  $region25: #{binary_classification_forward.1} parent=0 // pred_fallthru
    _
  // Predicated region
  $region26: #{binary_classification_forward.1} parent=0 // pred_check
    _
  $region27: #{binary_classification_forward.1} parent=0 // pred_check_branch
    %25 = sbr.rel (0) target = $region29
  $region28: #{binary_classification_forward.1} parent=0 // pred_region
    _
  $region29: #{binary_classification_forward.1} parent=0 // pred_fallthru
    _
  %v26 = vld [vmem:[%s0] sm:$0xff]
  %v27 = vld [vmem:[%s0 + $0x8] sm:$0xff]
  %v28 = vld [vmem:[%s0 + $0x10] sm:$0xff]
  %v29 = vld [vmem:[%s0 + $0x18] sm:$0xff]
  %v30 = vld [vmem:[%s0 + $0x20] sm:$0xff]
  %v31 = vld [vmem:[%s0 + $0x28] sm:$0xff]
  %v32 = vld [vmem:[%s0 + $0x30] sm:$0xff]
  %v33 = vld [vmem:[%s0 + $0x38] sm:$0xff]
  %v34 = vpack.c.bf16 %v26, %v26
  %v35 = vpack.c.bf16 %v27, %v27
  %v36 = vpack.c.bf16 %v28, %v28
  %v37 = vpack.c.bf16 %v29, %v29
  %v38 = vpack.c.bf16 %v30, %v30
  %v39 = vpack.c.bf16 %v31, %v31
  %v40 = vpack.c.bf16 %v32, %v32
  %v41 = vpack.c.bf16 %v33, %v33
  %v42 = vld [vmem:[%s1] sm:$0xf]
  %v43 = vld [vmem:[%s1 + $0x4] sm:$0xf]
  %v44 = vld [vmem:[%s1 + $0x8] sm:$0xf]
  %v45 = vld [vmem:[%s1 + $0xc] sm:$0xf]
  %v46 = vld [vmem:[%s1 + $0x10] sm:$0xf]
  %v47 = vld [vmem:[%s1 + $0x14] sm:$0xf]
  %v48 = vld [vmem:[%s1 + $0x18] sm:$0xf]
  %v49 = vld [vmem:[%s1 + $0x1c] sm:$0xf]
  %v50 = vld [vmem:[%s1 + $0x20] sm:$0xf]
  %v51 = vld [vmem:[%s1 + $0x24] sm:$0xf]
  %v52 = vld [vmem:[%s1 + $0x28] sm:$0xf]
  %v53 = vld [vmem:[%s1 + $0x2c] sm:$0xf]
  %v54 = vld [vmem:[%s1 + $0x30] sm:$0xf]
  %v55 = vld [vmem:[%s1 + $0x34] sm:$0xf]
  %v56 = vld [vmem:[%s1 + $0x38] sm:$0xf]
  %v57 = vld [vmem:[%s1 + $0x3c] sm:$0xf]
  %v58 = vld [vmem:[%s1 + $0x40] sm:$0xf]
  %v59 = vld [vmem:[%s1 + $0x44] sm:$0xf]
  %v60 = vld [vmem:[%s1 + $0x48] sm:$0xf]
  %v61 = vld [vmem:[%s1 + $0x4c] sm:$0xf]
  %v62 = vld [vmem:[%s1 + $0x50] sm:$0xf]
  %v63 = vld [vmem:[%s1 + $0x54] sm:$0xf]
  %v64 = vld [vmem:[%s1 + $0x58] sm:$0xf]
  %v65 = vld [vmem:[%s1 + $0x5c] sm:$0xf]
  %v66 = vld [vmem:[%s1 + $0x60] sm:$0xf]
  %v67 = vld [vmem:[%s1 + $0x64] sm:$0xf]
  %v68 = vld [vmem:[%s1 + $0x68] sm:$0xf]
  %v69 = vld [vmem:[%s1 + $0x6c] sm:$0xf]
  %v70 = vld [vmem:[%s1 + $0x70] sm:$0xf]
  %v71 = vld [vmem:[%s1 + $0x74] sm:$0xf]
  %v72 = vld [vmem:[%s1 + $0x78] sm:$0xf]
  %v73 = vld [vmem:[%s1 + $0x7c] sm:$0xf]
  %v74 = vld [vmem:[%s1 + $0x80] sm:$0xf]
  %v75 = vld [vmem:[%s1 + $0x84] sm:$0xf]
  %v76 = vld [vmem:[%s1 + $0x88] sm:$0xf]
  %v77 = vld [vmem:[%s1 + $0x8c] sm:$0xf]
  %v78 = vld [vmem:[%s1 + $0x90] sm:$0xf]
  %v79 = vld [vmem:[%s1 + $0x94] sm:$0xf]
  %v80 = vld [vmem:[%s1 + $0x98] sm:$0xf]
  %v81 = vld [vmem:[%s1 + $0x9c] sm:$0xf]
  %v82 = vld [vmem:[%s1 + $0xa0] sm:$0xf]
  %v83 = vld [vmem:[%s1 + $0xa4] sm:$0xf]
  %v84 = vld [vmem:[%s1 + $0xa8] sm:$0xf]
  %v85 = vld [vmem:[%s1 + $0xac] sm:$0xf]
  %v86 = vld [vmem:[%s1 + $0xb0] sm:$0xf]
  %v87 = vld [vmem:[%s1 + $0xb4] sm:$0xf]
  %v88 = vld [vmem:[%s1 + $0xb8] sm:$0xf]
  %v89 = vld [vmem:[%s1 + $0xbc] sm:$0xf]
  %v90 = vld [vmem:[%s1 + $0xc0] sm:$0xf]
  %v91 = vld [vmem:[%s1 + $0xc4] sm:$0xf]
  %v92 = vld [vmem:[%s1 + $0xc8] sm:$0xf]
  %v93 = vld [vmem:[%s1 + $0xcc] sm:$0xf]
  %v94 = vld [vmem:[%s1 + $0xd0] sm:$0xf]
  %v95 = vld [vmem:[%s1 + $0xd4] sm:$0xf]
  %v96 = vld [vmem:[%s1 + $0xd8] sm:$0xf]
  %v97 = vld [vmem:[%s1 + $0xdc] sm:$0xf]
  %v98 = vld [vmem:[%s1 + $0xe0] sm:$0xf]
  %v99 = vld [vmem:[%s1 + $0xe4] sm:$0xf]
  %v100 = vld [vmem:[%s1 + $0xe8] sm:$0xf]
  %v101 = vld [vmem:[%s1 + $0xec] sm:$0xf]
  %v102 = vld [vmem:[%s1 + $0xf0] sm:$0xf]
  %v103 = vld [vmem:[%s1 + $0xf4] sm:$0xf]
  %v104 = vld [vmem:[%s1 + $0xf8] sm:$0xf]
  %v105 = vld [vmem:[%s1 + $0xfc] sm:$0xf]
  %v106 = vld [vmem:[%s1 + $0x100] sm:$0xf]
  %v107 = vld [vmem:[%s1 + $0x104] sm:$0xf]
  %v108 = vld [vmem:[%s1 + $0x108] sm:$0xf]
  %v109 = vld [vmem:[%s1 + $0x10c] sm:$0xf]
  %v110 = vld [vmem:[%s1 + $0x110] sm:$0xf]
  %v111 = vld [vmem:[%s1 + $0x114] sm:$0xf]
  %v112 = vld [vmem:[%s1 + $0x118] sm:$0xf]
  %v113 = vld [vmem:[%s1 + $0x11c] sm:$0xf]
  %v114 = vld [vmem:[%s1 + $0x120] sm:$0xf]
  %v115 = vld [vmem:[%s1 + $0x124] sm:$0xf]
  %v116 = vld [vmem:[%s1 + $0x128] sm:$0xf]
  %v117 = vld [vmem:[%s1 + $0x12c] sm:$0xf]
  %v118 = vld [vmem:[%s1 + $0x130] sm:$0xf]
  %v119 = vld [vmem:[%s1 + $0x134] sm:$0xf]
  %v120 = vld [vmem:[%s1 + $0x138] sm:$0xf]
  %v121 = vld [vmem:[%s1 + $0x13c] sm:$0xf]
  %v122 = vld [vmem:[%s1 + $0x140] sm:$0xf]
  %v123 = vld [vmem:[%s1 + $0x144] sm:$0xf]
  %v124 = vld [vmem:[%s1 + $0x148] sm:$0xf]
  %v125 = vld [vmem:[%s1 + $0x14c] sm:$0xf]
  %v126 = vld [vmem:[%s1 + $0x150] sm:$0xf]
  %v127 = vld [vmem:[%s1 + $0x154] sm:$0xf]
  %v128 = vld [vmem:[%s1 + $0x158] sm:$0xf]
  %v129 = vld [vmem:[%s1 + $0x15c] sm:$0xf]
  %v130 = vld [vmem:[%s1 + $0x160] sm:$0xf]
  %v131 = vld [vmem:[%s1 + $0x164] sm:$0xf]
  %v132 = vld [vmem:[%s1 + $0x168] sm:$0xf]
  %v133 = vld [vmem:[%s1 + $0x16c] sm:$0xf]
  %v134 = vld [vmem:[%s1 + $0x170] sm:$0xf]
  %v135 = vld [vmem:[%s1 + $0x174] sm:$0xf]
  %v136 = vld [vmem:[%s1 + $0x178] sm:$0xf]
  %v137 = vld [vmem:[%s1 + $0x17c] sm:$0xf]
  %v138 = vld [vmem:[%s1 + $0x180] sm:$0xf]
  %v139 = vld [vmem:[%s1 + $0x184] sm:$0xf]
  %v140 = vld [vmem:[%s1 + $0x188] sm:$0xf]
  %v141 = vld [vmem:[%s1 + $0x18c] sm:$0xf]
  %v142 = vld [vmem:[%s1 + $0x190] sm:$0xf]
  %v143 = vld [vmem:[%s1 + $0x194] sm:$0xf]
  %v144 = vld [vmem:[%s1 + $0x198] sm:$0xf]
  %v145 = vld [vmem:[%s1 + $0x19c] sm:$0xf]
  %v146 = vld [vmem:[%s1 + $0x1a0] sm:$0xf]
  %v147 = vld [vmem:[%s1 + $0x1a4] sm:$0xf]
  %v148 = vld [vmem:[%s1 + $0x1a8] sm:$0xf]
  %v149 = vld [vmem:[%s1 + $0x1ac] sm:$0xf]
  %v150 = vld [vmem:[%s1 + $0x1b0] sm:$0xf]
  %v151 = vld [vmem:[%s1 + $0x1b4] sm:$0xf]
  %v152 = vld [vmem:[%s1 + $0x1b8] sm:$0xf]
  %v153 = vld [vmem:[%s1 + $0x1bc] sm:$0xf]
  %v154 = vld [vmem:[%s1 + $0x1c0] sm:$0xf]
  %v155 = vld [vmem:[%s1 + $0x1c4] sm:$0xf]
  %v156 = vld [vmem:[%s1 + $0x1c8] sm:$0xf]
  %v157 = vld [vmem:[%s1 + $0x1cc] sm:$0xf]
  %v158 = vld [vmem:[%s1 + $0x1d0] sm:$0xf]
  %v159 = vld [vmem:[%s1 + $0x1d4] sm:$0xf]
  %v160 = vld [vmem:[%s1 + $0x1d8] sm:$0xf]
  %v161 = vld [vmem:[%s1 + $0x1dc] sm:$0xf]
  %v162 = vld [vmem:[%s1 + $0x1e0] sm:$0xf]
  %v163 = vld [vmem:[%s1 + $0x1e4] sm:$0xf]
  %v164 = vld [vmem:[%s1 + $0x1e8] sm:$0xf]
  %v165 = vld [vmem:[%s1 + $0x1ec] sm:$0xf]
  %v166 = vld [vmem:[%s1 + $0x1f0] sm:$0xf]
  %v167 = vld [vmem:[%s1 + $0x1f4] sm:$0xf]
  %v168 = vld [vmem:[%s1 + $0x1f8] sm:$0xf]
  %v169 = vld [vmem:[%s1 + $0x1fc] sm:$0xf]
  %v170 = vld [vmem:[%s2] sm:$0x1]
  %v172 = vperm.slane %v170, 0
  %v302 = vunpack.c.l.b16 %v42
  %v303 = vunpack.c.l.b16 %v43
  %v304 = vunpack.c.l.b16 %v44
  %v305 = vunpack.c.l.b16 %v45
  %v306 = vunpack.c.l.b16 %v46
  %v307 = vunpack.c.l.b16 %v47
  %v308 = vunpack.c.l.b16 %v48
  %v309 = vunpack.c.l.b16 %v49
  %v310 = vunpack.c.l.b16 %v50
  %v311 = vunpack.c.l.b16 %v51
  %v312 = vunpack.c.l.b16 %v52
  %v313 = vunpack.c.l.b16 %v53
  %v314 = vunpack.c.l.b16 %v54
  %v315 = vunpack.c.l.b16 %v55
  %v316 = vunpack.c.l.b16 %v56
  %v317 = vunpack.c.l.b16 %v57
  %v318 = vunpack.c.l.b16 %v58
  %v319 = vunpack.c.l.b16 %v59
  %v320 = vunpack.c.l.b16 %v60
  %v321 = vunpack.c.l.b16 %v61
  %v322 = vunpack.c.l.b16 %v62
  %v323 = vunpack.c.l.b16 %v63
  %v324 = vunpack.c.l.b16 %v64
  %v325 = vunpack.c.l.b16 %v65
  %v326 = vunpack.c.l.b16 %v66
  %v327 = vunpack.c.l.b16 %v67
  %v328 = vunpack.c.l.b16 %v68
  %v329 = vunpack.c.l.b16 %v69
  %v330 = vunpack.c.l.b16 %v70
  %v331 = vunpack.c.l.b16 %v71
  %v332 = vunpack.c.l.b16 %v72
  %v333 = vunpack.c.l.b16 %v73
  %v334 = vunpack.c.l.b16 %v74
  %v335 = vunpack.c.l.b16 %v75
  %v336 = vunpack.c.l.b16 %v76
  %v337 = vunpack.c.l.b16 %v77
  %v338 = vunpack.c.l.b16 %v78
  %v339 = vunpack.c.l.b16 %v79
  %v340 = vunpack.c.l.b16 %v80
  %v341 = vunpack.c.l.b16 %v81
  %v342 = vunpack.c.l.b16 %v82
  %v343 = vunpack.c.l.b16 %v83
  %v344 = vunpack.c.l.b16 %v84
  %v345 = vunpack.c.l.b16 %v85
  %v346 = vunpack.c.l.b16 %v86
  %v347 = vunpack.c.l.b16 %v87
  %v348 = vunpack.c.l.b16 %v88
  %v349 = vunpack.c.l.b16 %v89
  %v350 = vunpack.c.l.b16 %v90
  %v351 = vunpack.c.l.b16 %v91
  %v352 = vunpack.c.l.b16 %v92
  %v353 = vunpack.c.l.b16 %v93
  %v354 = vunpack.c.l.b16 %v94
  %v355 = vunpack.c.l.b16 %v95
  %v356 = vunpack.c.l.b16 %v96
  %v357 = vunpack.c.l.b16 %v97
  %v358 = vunpack.c.l.b16 %v98
  %v359 = vunpack.c.l.b16 %v99
  %v360 = vunpack.c.l.b16 %v100
  %v361 = vunpack.c.l.b16 %v101
  %v362 = vunpack.c.l.b16 %v102
  %v363 = vunpack.c.l.b16 %v103
  %v364 = vunpack.c.l.b16 %v104
  %v365 = vunpack.c.l.b16 %v105
  %v366 = vunpack.c.l.b16 %v106
  %v367 = vunpack.c.l.b16 %v107
  %v368 = vunpack.c.l.b16 %v108
  %v369 = vunpack.c.l.b16 %v109
  %v370 = vunpack.c.l.b16 %v110
  %v371 = vunpack.c.l.b16 %v111
  %v372 = vunpack.c.l.b16 %v112
  %v373 = vunpack.c.l.b16 %v113
  %v374 = vunpack.c.l.b16 %v114
  %v375 = vunpack.c.l.b16 %v115
  %v376 = vunpack.c.l.b16 %v116
  %v377 = vunpack.c.l.b16 %v117
  %v378 = vunpack.c.l.b16 %v118
  %v379 = vunpack.c.l.b16 %v119
  %v380 = vunpack.c.l.b16 %v120
  %v381 = vunpack.c.l.b16 %v121
  %v382 = vunpack.c.l.b16 %v122
  %v383 = vunpack.c.l.b16 %v123
  %v384 = vunpack.c.l.b16 %v124
  %v385 = vunpack.c.l.b16 %v125
  %v386 = vunpack.c.l.b16 %v126
  %v387 = vunpack.c.l.b16 %v127
  %v388 = vunpack.c.l.b16 %v128
  %v389 = vunpack.c.l.b16 %v129
  %v390 = vunpack.c.l.b16 %v130
  %v391 = vunpack.c.l.b16 %v131
  %v392 = vunpack.c.l.b16 %v132
  %v393 = vunpack.c.l.b16 %v133
  %v394 = vunpack.c.l.b16 %v134
  %v395 = vunpack.c.l.b16 %v135
  %v396 = vunpack.c.l.b16 %v136
  %v397 = vunpack.c.l.b16 %v137
  %v398 = vunpack.c.l.b16 %v138
  %v399 = vunpack.c.l.b16 %v139
  %v400 = vunpack.c.l.b16 %v140
  %v401 = vunpack.c.l.b16 %v141
  %v402 = vunpack.c.l.b16 %v142
  %v403 = vunpack.c.l.b16 %v143
  %v404 = vunpack.c.l.b16 %v144
  %v405 = vunpack.c.l.b16 %v145
  %v406 = vunpack.c.l.b16 %v146
  %v407 = vunpack.c.l.b16 %v147
  %v408 = vunpack.c.l.b16 %v148
  %v409 = vunpack.c.l.b16 %v149
  %v410 = vunpack.c.l.b16 %v150
  %v411 = vunpack.c.l.b16 %v151
  %v412 = vunpack.c.l.b16 %v152
  %v413 = vunpack.c.l.b16 %v153
  %v414 = vunpack.c.l.b16 %v154
  %v415 = vunpack.c.l.b16 %v155
  %v416 = vunpack.c.l.b16 %v156
  %v417 = vunpack.c.l.b16 %v157
  %v418 = vunpack.c.l.b16 %v158
  %v419 = vunpack.c.l.b16 %v159
  %v420 = vunpack.c.l.b16 %v160
  %v421 = vunpack.c.l.b16 %v161
  %v422 = vunpack.c.l.b16 %v162
  %v423 = vunpack.c.l.b16 %v163
  %v424 = vunpack.c.l.b16 %v164
  %v425 = vunpack.c.l.b16 %v165
  %v426 = vunpack.c.l.b16 %v166
  %v427 = vunpack.c.l.b16 %v167
  %v428 = vunpack.c.l.b16 %v168
  %v429 = vunpack.c.l.b16 %v169
  %v430 = vpack.c.b16 %v303, %v302
  %v431 = vpack.c.b16 %v305, %v304
  %v432 = vpack.c.b16 %v307, %v306
  %v433 = vpack.c.b16 %v309, %v308
  %v434 = vpack.c.b16 %v311, %v310
  %v435 = vpack.c.b16 %v313, %v312
  %v436 = vpack.c.b16 %v315, %v314
  %v437 = vpack.c.b16 %v317, %v316
  %v438 = vpack.c.b16 %v319, %v318
  %v439 = vpack.c.b16 %v321, %v320
  %v440 = vpack.c.b16 %v323, %v322
  %v441 = vpack.c.b16 %v325, %v324
  %v442 = vpack.c.b16 %v327, %v326
  %v443 = vpack.c.b16 %v329, %v328
  %v444 = vpack.c.b16 %v331, %v330
  %v445 = vpack.c.b16 %v333, %v332
  %v446 = vpack.c.b16 %v335, %v334
  %v447 = vpack.c.b16 %v337, %v336
  %v448 = vpack.c.b16 %v339, %v338
  %v449 = vpack.c.b16 %v341, %v340
  %v450 = vpack.c.b16 %v343, %v342
  %v451 = vpack.c.b16 %v345, %v344
  %v452 = vpack.c.b16 %v347, %v346
  %v453 = vpack.c.b16 %v349, %v348
  %v454 = vpack.c.b16 %v351, %v350
  %v455 = vpack.c.b16 %v353, %v352
  %v456 = vpack.c.b16 %v355, %v354
  %v457 = vpack.c.b16 %v357, %v356
  %v458 = vpack.c.b16 %v359, %v358
  %v459 = vpack.c.b16 %v361, %v360
  %v460 = vpack.c.b16 %v363, %v362
  %v461 = vpack.c.b16 %v365, %v364
  %v462 = vpack.c.b16 %v367, %v366
  %v463 = vpack.c.b16 %v369, %v368
  %v464 = vpack.c.b16 %v371, %v370
  %v465 = vpack.c.b16 %v373, %v372
  %v466 = vpack.c.b16 %v375, %v374
  %v467 = vpack.c.b16 %v377, %v376
  %v468 = vpack.c.b16 %v379, %v378
  %v469 = vpack.c.b16 %v381, %v380
  %v470 = vpack.c.b16 %v383, %v382
  %v471 = vpack.c.b16 %v385, %v384
  %v472 = vpack.c.b16 %v387, %v386
  %v473 = vpack.c.b16 %v389, %v388
  %v474 = vpack.c.b16 %v391, %v390
  %v475 = vpack.c.b16 %v393, %v392
  %v476 = vpack.c.b16 %v395, %v394
  %v477 = vpack.c.b16 %v397, %v396
  %v478 = vpack.c.b16 %v399, %v398
  %v479 = vpack.c.b16 %v401, %v400
  %v480 = vpack.c.b16 %v403, %v402
  %v481 = vpack.c.b16 %v405, %v404
  %v482 = vpack.c.b16 %v407, %v406
  %v483 = vpack.c.b16 %v409, %v408
  %v484 = vpack.c.b16 %v411, %v410
  %v485 = vpack.c.b16 %v413, %v412
  %v486 = vpack.c.b16 %v415, %v414
  %v487 = vpack.c.b16 %v417, %v416
  %v488 = vpack.c.b16 %v419, %v418
  %v489 = vpack.c.b16 %v421, %v420
  %v490 = vpack.c.b16 %v423, %v422
  %v491 = vpack.c.b16 %v425, %v424
  %v492 = vpack.c.b16 %v427, %v426
  %v493 = vpack.c.b16 %v429, %v428
  %558 = vmatpush.bf16.msra.mxu0 %v437
  %559 = vmatpush.bf16.msra.mxu0 %v436
  %560 = vmatpush.bf16.msra.mxu0 %v435
  %561 = vmatpush.bf16.msra.mxu0 %v434
  %562 = vmatpush.bf16.msra.mxu0 %v433
  %563 = vmatpush.bf16.msra.mxu0 %v432
  %564 = vmatpush.bf16.msra.mxu0 %v431
  %565 = vmatpush.bf16.msra.mxu0 %v430
  %566 = vmatmul.bf16.gmra.mxu0 %v34
  %v567 = vpop.f32.mrf.mxu0
  %v568 = vadd.f32 %v172, %v567
  %v569 = vpop.f32.mrf.mxu0
  %570 = vdwg.mxu0
  %571 = vmatpush.bf16.msra.mxu0 %v445
  %572 = vmatpush.bf16.msra.mxu0 %v444
  %573 = vmatpush.bf16.msra.mxu0 %v443
  %574 = vmatpush.bf16.msra.mxu0 %v442
  %575 = vmatpush.bf16.msra.mxu0 %v441
  %576 = vmatpush.bf16.msra.mxu0 %v440
  %577 = vmatpush.bf16.msra.mxu0 %v439
  %578 = vmatpush.bf16.msra.mxu0 %v438
  %579 = vmatmul.bf16.gmra.mxu0 %v35
  %v580 = vpop.f32.mrf.mxu0
  %v581 = vadd.f32 %v568, %v580
  %v582 = vpop.f32.mrf.mxu0
  %583 = vdwg.mxu0
  %584 = vmatpush.bf16.msra.mxu0 %v453
  %585 = vmatpush.bf16.msra.mxu0 %v452
  %586 = vmatpush.bf16.msra.mxu0 %v451
  %587 = vmatpush.bf16.msra.mxu0 %v450
  %588 = vmatpush.bf16.msra.mxu0 %v449
  %589 = vmatpush.bf16.msra.mxu0 %v448
  %590 = vmatpush.bf16.msra.mxu0 %v447
  %591 = vmatpush.bf16.msra.mxu0 %v446
  %592 = vmatmul.bf16.gmra.mxu0 %v36
  %v593 = vpop.f32.mrf.mxu0
  %v594 = vadd.f32 %v581, %v593
  %v595 = vpop.f32.mrf.mxu0
  %596 = vdwg.mxu0
  %597 = vmatpush.bf16.msra.mxu0 %v461
  %598 = vmatpush.bf16.msra.mxu0 %v460
  %599 = vmatpush.bf16.msra.mxu0 %v459
  %600 = vmatpush.bf16.msra.mxu0 %v458
  %601 = vmatpush.bf16.msra.mxu0 %v457
  %602 = vmatpush.bf16.msra.mxu0 %v456
  %603 = vmatpush.bf16.msra.mxu0 %v455
  %604 = vmatpush.bf16.msra.mxu0 %v454
  %605 = vmatmul.bf16.gmra.mxu0 %v37
  %v606 = vpop.f32.mrf.mxu0
  %v607 = vadd.f32 %v594, %v606
  %v608 = vpop.f32.mrf.mxu0
  %609 = vdwg.mxu0
  %610 = vmatpush.bf16.msra.mxu0 %v469
  %611 = vmatpush.bf16.msra.mxu0 %v468
  %612 = vmatpush.bf16.msra.mxu0 %v467
  %613 = vmatpush.bf16.msra.mxu0 %v466
  %614 = vmatpush.bf16.msra.mxu0 %v465
  %615 = vmatpush.bf16.msra.mxu0 %v464
  %616 = vmatpush.bf16.msra.mxu0 %v463
  %617 = vmatpush.bf16.msra.mxu0 %v462
  %618 = vmatmul.bf16.gmra.mxu0 %v38
  %v619 = vpop.f32.mrf.mxu0
  %v620 = vadd.f32 %v607, %v619
  %v621 = vpop.f32.mrf.mxu0
  %622 = vdwg.mxu0
  %623 = vmatpush.bf16.msra.mxu0 %v477
  %624 = vmatpush.bf16.msra.mxu0 %v476
  %625 = vmatpush.bf16.msra.mxu0 %v475
  %626 = vmatpush.bf16.msra.mxu0 %v474
  %627 = vmatpush.bf16.msra.mxu0 %v473
  %628 = vmatpush.bf16.msra.mxu0 %v472
  %629 = vmatpush.bf16.msra.mxu0 %v471
  %630 = vmatpush.bf16.msra.mxu0 %v470
  %631 = vmatmul.bf16.gmra.mxu0 %v39
  %v632 = vpop.f32.mrf.mxu0
  %v633 = vadd.f32 %v620, %v632
  %v634 = vpop.f32.mrf.mxu0
  %635 = vdwg.mxu0
  %636 = vmatpush.bf16.msra.mxu0 %v485
  %637 = vmatpush.bf16.msra.mxu0 %v484
  %638 = vmatpush.bf16.msra.mxu0 %v483
  %639 = vmatpush.bf16.msra.mxu0 %v482
  %640 = vmatpush.bf16.msra.mxu0 %v481
  %641 = vmatpush.bf16.msra.mxu0 %v480
  %642 = vmatpush.bf16.msra.mxu0 %v479
  %643 = vmatpush.bf16.msra.mxu0 %v478
  %644 = vmatmul.bf16.gmra.mxu0 %v40
  %v645 = vpop.f32.mrf.mxu0
  %v646 = vadd.f32 %v633, %v645
  %v647 = vpop.f32.mrf.mxu0
  %648 = vdwg.mxu0
  %649 = vmatpush.bf16.msra.mxu0 %v493
  %650 = vmatpush.bf16.msra.mxu0 %v492
  %651 = vmatpush.bf16.msra.mxu0 %v491
  %652 = vmatpush.bf16.msra.mxu0 %v490
  %653 = vmatpush.bf16.msra.mxu0 %v489
  %654 = vmatpush.bf16.msra.mxu0 %v488
  %655 = vmatpush.bf16.msra.mxu0 %v487
  %656 = vmatpush.bf16.msra.mxu0 %v486
  %657 = vmatmul.bf16.gmra.mxu0 %v41
  %v658 = vpop.f32.mrf.mxu0
  %v659 = vadd.f32 %v646, %v658
  %v660 = vpop.f32.mrf.mxu0
  %661 = vdwg.mxu0
  %v662 = vmax.f32 %v659, 0.0
  %v663 = vld [vmem:[%s3] sm:$0xff]
  %v664 = vld [vmem:[%s3 + $0x8] sm:$0xff]
  %v665 = vld [vmem:[%s3 + $0x10] sm:$0xff]
  %v666 = vld [vmem:[%s3 + $0x18] sm:$0xff]
  %v667 = vld [vmem:[%s3 + $0x20] sm:$0xff]
  %v668 = vld [vmem:[%s3 + $0x28] sm:$0xff]
  %v669 = vld [vmem:[%s3 + $0x30] sm:$0xff]
  %v670 = vld [vmem:[%s3 + $0x38] sm:$0xff]
  %v671 = vld [vmem:[%s3 + $0x40] sm:$0xff]
  %v672 = vld [vmem:[%s3 + $0x48] sm:$0xff]
  %v673 = vld [vmem:[%s3 + $0x50] sm:$0xff]
  %v674 = vld [vmem:[%s3 + $0x58] sm:$0xff]
  %v675 = vld [vmem:[%s3 + $0x60] sm:$0xff]
  %v676 = vld [vmem:[%s3 + $0x68] sm:$0xff]
  %v677 = vld [vmem:[%s3 + $0x70] sm:$0xff]
  %v678 = vld [vmem:[%s3 + $0x78] sm:$0xff]
  %v679 = vld [vmem:[%s4] sm:$0x1]
  %v681 = vperm.slane %v679, 0
  %683 = vmatpush.msra.mxu0 %v678
  %684 = vmatpush.msra.mxu0 %v677
  %685 = vmatpush.msra.mxu0 %v676
  %686 = vmatpush.msra.mxu0 %v675
  %687 = vmatpush.msra.mxu0 %v674
  %688 = vmatpush.msra.mxu0 %v673
  %689 = vmatpush.msra.mxu0 %v672
  %690 = vmatpush.msra.mxu0 %v671
  %691 = vmatpush.msra.mxu0 %v670
  %692 = vmatpush.msra.mxu0 %v669
  %693 = vmatpush.msra.mxu0 %v668
  %694 = vmatpush.msra.mxu0 %v667
  %695 = vmatpush.msra.mxu0 %v666
  %696 = vmatpush.msra.mxu0 %v665
  %697 = vmatpush.msra.mxu0 %v664
  %698 = vmatpush.msra.mxu0 %v663
  %699 = vmatmul.f32.gmra.mxu0 %v662
  %v700 = vpop.f32.mrf.mxu0
  %v701 = vadd.f32 %v681, %v700
  %702 = vdwg.mxu0
  %v703 = vmax.f32 %v701, 0.0
  %v704 = vld [vmem:[%s5] sm:$0xff]
  %v705 = vld [vmem:[%s5 + $0x8] sm:$0xff]
  %v706 = vld [vmem:[%s5 + $0x10] sm:$0xff]
  %v707 = vld [vmem:[%s5 + $0x18] sm:$0xff]
  %v708 = vld [vmem:[%s5 + $0x20] sm:$0xff]
  %v709 = vld [vmem:[%s5 + $0x28] sm:$0xff]
  %v710 = vld [vmem:[%s5 + $0x30] sm:$0xff]
  %v711 = vld [vmem:[%s5 + $0x38] sm:$0xff]
  %v712 = vld [vmem:[%s6] sm:$0x1]
  %v714 = vperm.slane %v712, 0
  %vm716 = vcmask 523264
  %v718 = vsel %vm716, %v703, 0
  %720 = vmatpush.msra.mxu0 0.0
  %721 = vmatpush.msra.mxu0 0.0
  %722 = vmatpush.msra.mxu0 0.0
  %723 = vmatpush.msra.mxu0 0.0
  %724 = vmatpush.msra.mxu0 0.0
  %725 = vmatpush.msra.mxu0 0.0
  %726 = vmatpush.msra.mxu0 0.0
  %727 = vmatpush.msra.mxu0 0.0
  %728 = vmatpush.msra.mxu0 %v711
  %729 = vmatpush.msra.mxu0 %v710
  %730 = vmatpush.msra.mxu0 %v709
  %731 = vmatpush.msra.mxu0 %v708
  %732 = vmatpush.msra.mxu0 %v707
  %733 = vmatpush.msra.mxu0 %v706
  %734 = vmatpush.msra.mxu0 %v705
  %735 = vmatpush.msra.mxu0 %v704
  %736 = vmatmul.f32.gmra.mxu0 %v718
  %v737 = vpop.f32.mrf.mxu0
  %v738 = vadd.f32 %v714, %v737
  %739 = vdwg.mxu0
  %v740 = vpack.c.bf16 %v738, %v738
  %741 = vst [vmem:[%s7] sm:$0xf] %v740
  // Predicated region
  $region30: #{binary_classification_forward.1} parent=0 // pred_check
    _
  $region31: #{binary_classification_forward.1} parent=0 // pred_check_branch
    %743 = sbr.rel (0) target = $region33
  $region32: #{binary_classification_forward.1} parent=0 // pred_region
    _
  $region33: #{binary_classification_forward.1} parent=0 // pred_fallthru
    _
  // Predicated region
  $region34: #{binary_classification_forward.1} parent=0 // pred_check
    _
  $region35: #{binary_classification_forward.1} parent=0 // pred_check_branch
    %745 = sbr.rel (0) target = $region37
  $region36: #{binary_classification_forward.1} parent=0 // pred_region
    _
  $region37: #{binary_classification_forward.1} parent=0 // pred_fallthru
    _

</llo_original>
